<compile_context>
chip_gen: v7x
topology: tpu7x:2x2x1
jax: 0.10.0
libtpu: 0.0.40
codegen_flags: <defaults>
</compile_context>

<pallas_src>
import functools

import jax
import jax.numpy as jnp
import numpy as np
from jax.experimental import pallas as pl
from jax.experimental.pallas import tpu as pltpu

LANE = 128


def _round_up(x, m):
    return (x + m - 1) // m * m


def _vmem_limit_bytes():
    """Generation-aware VMEM budget: ~75% of physical VMEM (headroom for
    compiler scratch / output double-buffers).  ~48 MiB on v7x, ~96 MiB on
    v5e/v6e.  Falls back to a conservative 48 MiB if the query fails."""
    try:
        cap = int(pltpu.get_tpu_info().vmem_capacity_bytes)
    except Exception:
        cap = 64 * 1024 * 1024
    return int(cap) * 3 // 4


def moe_fused_kernel(x_ref, w_ref, gb_ref, eb_ref, o_ref, *,
                     num_experts, gate_cols, d_pad):
    """One fused matmul for gate + all experts, then f32 softmax gating.

    x_ref : (TM, Din)                 f32 tokens (cast to w dtype in-kernel)
    w_ref : (Din, gate_cols + E*Dp)   compute dtype, packed [gate | expert_0 | ...]
    gb_ref: (1, gate_cols)            f32 gate bias (padded)
    eb_ref: (E, Dp)                   f32 expert biases (padded lane-dense)
    o_ref : (TM, Dp)                  lane-dense output (Dp = Dout padded to 128)
    """
    # Cast the token tile to the weight's compute dtype here (VPU work hidden
    # under the matmul; avoids a wrapper-side HBM pass over x).
    xq = x_ref[...].astype(w_ref.dtype)

    # Single wide MXU matmul; f32 accumulation regardless of operand dtype.
    y = jnp.dot(xq, w_ref[...], preferred_element_type=jnp.float32)

    # Gate: numerically-stable softmax over the first E columns; gate bias is
    # added only to this tiny logits slice (not a full-width bias pass).
    logits = y[:, :num_experts] + gb_ref[:, :num_experts]            # (TM, E)
    m = jnp.max(logits, axis=-1, keepdims=True)
    p = jnp.exp(logits - m)
    denom = jnp.sum(p, axis=-1, keepdims=True)
    gate = p * pl.reciprocal(denom, approx=True)                     # (TM, E) f32

    # Expert mixture: E static 128-lane-aligned slices with FMA accumulation
    # (no (E, Dp) reshape -> no sublane relayout, no XLU reduce).
    acc = gate[:, 0:1] * y[:, gate_cols:gate_cols + d_pad]
    for e in range(1, num_experts):
        start = gate_cols + e * d_pad
        acc = acc + gate[:, e:e + 1] * y[:, start:start + d_pad]

    # Expert biases folded in as a tiny (TM,E)x(E,Dp) MXU matmul; exact because
    # the mixture is linear in the expert outputs.
    acc = acc + jnp.dot(gate, eb_ref[...], preferred_element_type=jnp.float32)

    o_ref[...] = acc.astype(o_ref.dtype)


def pack_moe_params(gate_w, gate_b, expert_w, expert_b, compute_dtype=jnp.bfloat16):
    """One-time packing of PyTorch-layout params into fused weight + biases.

    gate_w:   (E, Din)       gate_b:   (E,)
    expert_w: (E, Dout, Din) expert_b: (E, Dout)
    Returns (w_all, gb, eb, gate_cols, d_pad):
      w_all: (Din, gate_cols + E*d_pad)  compute_dtype   packed [gate | experts]
      gb:    (1, gate_cols)              f32             gate bias (padded)
      eb:    (E, d_pad)                  f32             expert biases (padded)
    Call ONCE at parameter-init time, not per forward.
    NOTE: casting the gate columns to bf16 slightly perturbs logits; keep
    compute_dtype=f32 if exact routing for near-tied experts matters.
    """
    e, d_out, d_in = expert_w.shape
    gate_cols = _round_up(e, LANE)          # gate section padded to a lane group
    d_pad = _round_up(d_out, LANE)          # each expert's output padded lane-dense

    gate_blk = jnp.zeros((d_in, gate_cols), jnp.float32).at[:, :e].set(gate_w.T)
    ew = jnp.transpose(expert_w, (2, 0, 1))                      # (Din, E, Dout)
    ew = jnp.pad(ew, ((0, 0), (0, 0), (0, d_pad - d_out)))       # (Din, E, Dp)
    w_all = jnp.concatenate([gate_blk, ew.reshape(d_in, e * d_pad)], axis=1)
    w_all = w_all.astype(compute_dtype)

    gb = jnp.zeros((1, gate_cols), jnp.float32).at[0, :e].set(gate_b)
    eb = jnp.pad(expert_b, ((0, 0), (0, d_pad - d_out))).astype(jnp.float32)
    return w_all, gb, eb, gate_cols, d_pad


def moe_forward(x, w_all, gate_b, expert_b, *, num_experts, d_out, gate_cols,
                d_pad, tm=256, out_dtype=jnp.float32, slice_output=True):
    """x: (N, Din) f32; packed params from pack_moe_params.  Returns (N, Dout)."""
    n, d_in = x.shape
    c_tot = w_all.shape[1]

    # Token tile: big enough to amortize ~0.35us/step, small enough that the
    # grid has >=2 steps (so v7x's two TensorCores both get token tiles).
    # Keep tm a multiple of 16 when possible (bf16 sublane packing), else 8.
    half = pl.cdiv(n, 2)
    tm = max(8, min(tm, _round_up(half, 16) if half >= 16 else _round_up(half, 8)))
    grid = (pl.cdiv(n, tm),)   # ragged last tile is clipped by Pallas; no HBM pad

    kernel = functools.partial(moe_fused_kernel, num_experts=num_experts,
                               gate_cols=gate_cols, d_pad=d_pad)

    itemsize = jnp.dtype(w_all.dtype).itemsize
    flops = (2 * n * d_in * c_tot               # fused gate+experts matmul
             + 2 * n * num_experts * d_pad      # expert-bias matmul
             + 2 * n * num_experts * d_pad)     # mixture FMA
    bytes_accessed = (n * d_in * 4 + d_in * c_tot * itemsize
                      + (gate_cols + num_experts * d_pad) * 4
                      + n * d_pad * jnp.dtype(out_dtype).itemsize)
    cost = pl.CostEstimate(flops=int(flops),
                           transcendentals=int(n * (num_experts + 1)),
                           bytes_accessed=int(bytes_accessed))

    def call(single_buffer_weights):
        # Weight/bias blocks have a constant index_map -> they are resident;
        # single-buffer them so the pipeline doesn't waste VMEM double-buffering.
        resident = (dict(pipeline_mode=pl.Buffered(1))
                    if single_buffer_weights else {})
        return pl.pallas_call(
            kernel,
            out_shape=jax.ShapeDtypeStruct((n, d_pad), out_dtype),
            grid_spec=pltpu.PrefetchScalarGridSpec(
                num_scalar_prefetch=0,
                grid=grid,
                in_specs=[
                    pl.BlockSpec((tm, d_in), lambda i: (i, 0)),   # token tiles stream
                    pl.BlockSpec((d_in, c_tot), lambda i: (0, 0), **resident),
                    pl.BlockSpec((1, gate_cols), lambda i: (0, 0), **resident),
                    pl.BlockSpec((num_experts, d_pad), lambda i: (0, 0), **resident),
                ],
                out_specs=pl.BlockSpec((tm, d_pad), lambda i: (i, 0)),
            ),
            compiler_params=pltpu.CompilerParams(
                dimension_semantics=("parallel",),   # v7x: 2 TCs split token tiles
                vmem_limit_bytes=_vmem_limit_bytes(),
            ),
            cost_estimate=cost,
        )(x, w_all, gate_b, expert_b)

    try:
        out = jax.block_until_ready(call(True))
    except Exception:
        # Installed Pallas rejected pipeline_mode=pl.Buffered(1); use defaults.
        out = call(False)

    return out[:, :d_out] if slice_output else out


def moe_reference(x, gate_w, gate_b, expert_w, expert_b, compute_dtype=jnp.float32):
    """Plain-JAX reference of the intended MoE mixture (same operand dtype)."""
    xc = x.astype(compute_dtype)
    gw = gate_w.astype(compute_dtype)
    ew = expert_w.astype(compute_dtype)
    logits = jnp.dot(xc, gw.T, preferred_element_type=jnp.float32) + gate_b
    gate = jax.nn.softmax(logits, axis=-1)                                   # (N, E)
    expert_out = jnp.einsum("nd,eod->eno", xc, ew,
                            preferred_element_type=jnp.float32) + expert_b[:, None, :]
    return jnp.einsum("ne,eno->no", gate, expert_out)


if __name__ == "__main__":
    num_experts = 4
    input_size = 5
    output_size = 3
    batch = 10  # matches the demo in the reference module

    key = jax.random.PRNGKey(0)
    kx, kgw, kgb, kew, keb = jax.random.split(key, 5)

    bound = 1.0 / np.sqrt(input_size)
    x = jax.random.normal(kx, (batch, input_size), dtype=jnp.float32)
    gate_w = jax.random.uniform(kgw, (num_experts, input_size), jnp.float32, -bound, bound)
    gate_b = jax.random.uniform(kgb, (num_experts,), jnp.float32, -bound, bound)
    expert_w = jax.random.uniform(
        kew, (num_experts, output_size, input_size), jnp.float32, -bound, bound)
    expert_b = jax.random.uniform(
        keb, (num_experts, output_size), jnp.float32, -bound, bound)

    # Run both the f32 and the bf16-operand paths.  Tolerance covers the
    # approx-reciprocal softmax + reduced-precision MXU operands.
    for compute_dtype in (jnp.float32, jnp.bfloat16):
        w_all, gb, eb, gate_cols, d_pad = pack_moe_params(
            gate_w, gate_b, expert_w, expert_b, compute_dtype=compute_dtype)
        out = moe_forward(x, w_all, gb, eb, num_experts=num_experts,
                          d_out=output_size, gate_cols=gate_cols, d_pad=d_pad)
        out = jax.block_until_ready(out)
        ref = moe_reference(x, gate_w, gate_b, expert_w, expert_b,
                            compute_dtype=compute_dtype)
        np.testing.assert_allclose(np.asarray(out), np.asarray(ref),
                                   rtol=2e-2, atol=2e-2)

    print("KERNEL_OK")
</pallas_src>

<mosaic_0001>
module attributes {stable_mosaic.version = 11 : i64} {
  func.func @moe_fused_kernel(%arg0: i32, %arg1: memref<8x5xf32, #tpu.memory_space<vmem>>, %arg2: memref<5x640xf32, #tpu.memory_space<vmem>>, %arg3: memref<1x128xf32, #tpu.memory_space<vmem>>, %arg4: memref<4x128xf32, #tpu.memory_space<vmem>>, %arg5: memref<8x128xf32, #tpu.memory_space<vmem>>) attributes {dimension_semantics = [#tpu.dimension_semantics<parallel>], iteration_bounds = array<i64: 2>, scalar_prefetch = 0 : i64, scratch_operands = 0 : i64, tpu.core_type = #tpu.core_type<tc>, window_params = [{transform_indices = @transform_0, window_bounds = array<i64: 8, 5>}, {pipeline_mode = #tpu.pipeline_mode<synchronous>, transform_indices = @transform_1, window_bounds = array<i64: 5, 640>}, {pipeline_mode = #tpu.pipeline_mode<synchronous>, transform_indices = @transform_2, window_bounds = array<i64: 1, 128>}, {pipeline_mode = #tpu.pipeline_mode<synchronous>, transform_indices = @transform_3, window_bounds = array<i64: 4, 128>}, {transform_indices = @transform_4, window_bounds = array<i64: 8, 128>}]} {
    %c0 = arith.constant 0 : index
    %c0_0 = arith.constant 0 : index
    %0 = vector.load %arg1[%c0, %c0_0] : memref<8x5xf32, #tpu.memory_space<vmem>>, vector<8x5xf32>
    %c0_1 = arith.constant 0 : index
    %c0_2 = arith.constant 0 : index
    %1 = vector.load %arg2[%c0_1, %c0_2] : memref<5x640xf32, #tpu.memory_space<vmem>>, vector<5x640xf32>
    %cst = arith.constant dense<0.000000e+00> : vector<8x640xf32>
    %2 = tpu.matmul %0, %1, %cst {dimension_numbers = #tpu.dot_dimension_numbers<[1], [0], [0], [1], [0, 0, 1, 1], [], []>} : vector<8x5xf32>, vector<5x640xf32>, vector<8x640xf32> -> vector<8x640xf32>
    %3 = vector.extract_strided_slice %2 {offsets = [0, 0], sizes = [8, 4], strides = [1, 1]} : vector<8x640xf32> to vector<8x4xf32>
    %c0_3 = arith.constant 0 : index
    %c0_4 = arith.constant 0 : index
    %4 = vector.load %arg3[%c0_3, %c0_4] : memref<1x128xf32, #tpu.memory_space<vmem>>, vector<1x4xf32>
    %5 = vector.broadcast %4 : vector<1x4xf32> to vector<8x4xf32>
    %6 = arith.addf %3, %5 : vector<8x4xf32>
    %cst_5 = arith.constant dense<0xFF800000> : vector<8xf32>
    %7 = vector.multi_reduction <maximumf>, %6, %cst_5 [1] : vector<8x4xf32> to vector<8xf32>
    %8 = vector.shape_cast %7 : vector<8xf32> to vector<8x1xf32>
    %9 = vector.broadcast %8 : vector<8x1xf32> to vector<8x4xf32>
    %10 = arith.subf %6, %9 : vector<8x4xf32>
    %11 = math.exp %10 : vector<8x4xf32>
    %cst_6 = arith.constant dense<0.000000e+00> : vector<8xf32>
    %12 = vector.multi_reduction <add>, %11, %cst_6 [1] : vector<8x4xf32> to vector<8xf32>
    %13 = vector.shape_cast %12 : vector<8xf32> to vector<8x1xf32>
    %14 = tpu.reciprocal %13 {approx = true} : vector<8x1xf32> -> vector<8x1xf32>
    %15 = vector.broadcast %14 : vector<8x1xf32> to vector<8x4xf32>
    %16 = arith.mulf %11, %15 : vector<8x4xf32>
    %17 = vector.extract_strided_slice %16 {offsets = [0, 0], sizes = [8, 1], strides = [1, 1]} : vector<8x4xf32> to vector<8x1xf32>
    %18 = vector.extract_strided_slice %2 {offsets = [0, 128], sizes = [8, 128], strides = [1, 1]} : vector<8x640xf32> to vector<8x128xf32>
    %19 = vector.broadcast %17 : vector<8x1xf32> to vector<8x128xf32>
    %20 = arith.mulf %19, %18 : vector<8x128xf32>
    %21 = vector.extract_strided_slice %16 {offsets = [0, 1], sizes = [8, 1], strides = [1, 1]} : vector<8x4xf32> to vector<8x1xf32>
    %22 = vector.extract_strided_slice %2 {offsets = [0, 256], sizes = [8, 128], strides = [1, 1]} : vector<8x640xf32> to vector<8x128xf32>
    %23 = vector.broadcast %21 : vector<8x1xf32> to vector<8x128xf32>
    %24 = arith.mulf %23, %22 : vector<8x128xf32>
    %25 = arith.addf %20, %24 : vector<8x128xf32>
    %26 = vector.extract_strided_slice %16 {offsets = [0, 2], sizes = [8, 1], strides = [1, 1]} : vector<8x4xf32> to vector<8x1xf32>
    %27 = vector.extract_strided_slice %2 {offsets = [0, 384], sizes = [8, 128], strides = [1, 1]} : vector<8x640xf32> to vector<8x128xf32>
    %28 = vector.broadcast %26 : vector<8x1xf32> to vector<8x128xf32>
    %29 = arith.mulf %28, %27 : vector<8x128xf32>
    %30 = arith.addf %25, %29 : vector<8x128xf32>
    %31 = vector.extract_strided_slice %16 {offsets = [0, 3], sizes = [8, 1], strides = [1, 1]} : vector<8x4xf32> to vector<8x1xf32>
    %32 = vector.extract_strided_slice %2 {offsets = [0, 512], sizes = [8, 128], strides = [1, 1]} : vector<8x640xf32> to vector<8x128xf32>
    %33 = vector.broadcast %31 : vector<8x1xf32> to vector<8x128xf32>
    %34 = arith.mulf %33, %32 : vector<8x128xf32>
    %35 = arith.addf %30, %34 : vector<8x128xf32>
    %c0_7 = arith.constant 0 : index
    %c0_8 = arith.constant 0 : index
    %36 = vector.load %arg4[%c0_7, %c0_8] : memref<4x128xf32, #tpu.memory_space<vmem>>, vector<4x128xf32>
    %cst_9 = arith.constant dense<0.000000e+00> : vector<8x128xf32>
    %37 = tpu.matmul %16, %36, %cst_9 {dimension_numbers = #tpu.dot_dimension_numbers<[1], [0], [0], [1], [0, 0, 1, 1], [], []>} : vector<8x4xf32>, vector<4x128xf32>, vector<8x128xf32> -> vector<8x128xf32>
    %38 = arith.addf %35, %37 : vector<8x128xf32>
    %c0_10 = arith.constant 0 : index
    %c0_11 = arith.constant 0 : index
    %39 = vector.load %arg5[%c0_10, %c0_11] : memref<8x128xf32, #tpu.memory_space<vmem>>, vector<8x128xf32>
    tpu.vector_store %arg5[%c0_10, %c0_11], %38 {strides = array<i32>} : memref<8x128xf32, #tpu.memory_space<vmem>>, vector<8x128xf32>,
    return
  }
  func.func @transform_0(%arg0: i32) -> (i32, i32) {
    %c0_i32 = arith.constant 0 : i32
    %c0_i32_0 = arith.constant 0 : i32
    return %arg0, %c0_i32 : i32, i32
  }
  func.func @transform_1(%arg0: i32) -> (i32, i32) {
    %c0_i32 = arith.constant 0 : i32
    %c0_i32_0 = arith.constant 0 : i32
    %c0_i32_1 = arith.constant 0 : i32
    return %c0_i32, %c0_i32_0 : i32, i32
  }
  func.func @transform_2(%arg0: i32) -> (i32, i32) {
    %c0_i32 = arith.constant 0 : i32
    %c0_i32_0 = arith.constant 0 : i32
    %c0_i32_1 = arith.constant 0 : i32
    return %c0_i32, %c0_i32_0 : i32, i32
  }
  func.func @transform_3(%arg0: i32) -> (i32, i32) {
    %c0_i32 = arith.constant 0 : i32
    %c0_i32_0 = arith.constant 0 : i32
    %c0_i32_1 = arith.constant 0 : i32
    return %c0_i32, %c0_i32_0 : i32, i32
  }
  func.func @transform_4(%arg0: i32) -> (i32, i32) {
    %c0_i32 = arith.constant 0 : i32
    %c0_i32_0 = arith.constant 0 : i32
    return %arg0, %c0_i32 : i32, i32
  }
}

module attributes {stable_mosaic.version = 11 : i64} {
  func.func @moe_fused_kernel(%arg0: i32, %arg1: memref<8x5xf32, #tpu.memory_space<vmem>>, %arg2: memref<5x640xf32, #tpu.memory_space<vmem>>, %arg3: memref<1x128xf32, #tpu.memory_space<vmem>>, %arg4: memref<4x128xf32, #tpu.memory_space<vmem>>, %arg5: memref<8x128xf32, #tpu.memory_space<vmem>>) attributes {dimension_semantics = [#tpu.dimension_semantics<parallel>], iteration_bounds = array<i64: 2>, scalar_prefetch = 0 : i64, scratch_operands = 0 : i64, tpu.core_type = #tpu.core_type<tc>, window_params = [{transform_indices = @transform_0, window_bounds = array<i64: 8, 5>}, {pipeline_mode = #tpu.pipeline_mode<synchronous>, transform_indices = @transform_1, window_bounds = array<i64: 5, 640>}, {pipeline_mode = #tpu.pipeline_mode<synchronous>, transform_indices = @transform_2, window_bounds = array<i64: 1, 128>}, {pipeline_mode = #tpu.pipeline_mode<synchronous>, transform_indices = @transform_3, window_bounds = array<i64: 4, 128>}, {transform_indices = @transform_4, window_bounds = array<i64: 8, 128>}]} {
    %c0 = arith.constant 0 : index
    %c0_0 = arith.constant 0 : index
    %0 = vector.load %arg1[%c0, %c0_0] : memref<8x5xf32, #tpu.memory_space<vmem>>, vector<8x5xf32>
    %c0_1 = arith.constant 0 : index
    %c0_2 = arith.constant 0 : index
    %1 = vector.load %arg2[%c0_1, %c0_2] : memref<5x640xf32, #tpu.memory_space<vmem>>, vector<5x640xf32>
    %cst = arith.constant dense<0.000000e+00> : vector<8x640xf32>
    %2 = tpu.matmul %0, %1, %cst {dimension_numbers = #tpu.dot_dimension_numbers<[1], [0], [0], [1], [0, 0, 1, 1], [], []>} : vector<8x5xf32>, vector<5x640xf32>, vector<8x640xf32> -> vector<8x640xf32>
    %3 = vector.extract_strided_slice %2 {offsets = [0, 0], sizes = [8, 4], strides = [1, 1]} : vector<8x640xf32> to vector<8x4xf32>
    %c0_3 = arith.constant 0 : index
    %c0_4 = arith.constant 0 : index
    %4 = vector.load %arg3[%c0_3, %c0_4] : memref<1x128xf32, #tpu.memory_space<vmem>>, vector<1x4xf32>
    %5 = vector.broadcast %4 : vector<1x4xf32> to vector<8x4xf32>
    %6 = arith.addf %3, %5 : vector<8x4xf32>
    %cst_5 = arith.constant dense<0xFF800000> : vector<8xf32>
    %7 = vector.multi_reduction <maximumf>, %6, %cst_5 [1] : vector<8x4xf32> to vector<8xf32>
    %8 = vector.shape_cast %7 : vector<8xf32> to vector<8x1xf32>
    %9 = vector.broadcast %8 : vector<8x1xf32> to vector<8x4xf32>
    %10 = arith.subf %6, %9 : vector<8x4xf32>
    %11 = math.exp %10 : vector<8x4xf32>
    %cst_6 = arith.constant dense<0.000000e+00> : vector<8xf32>
    %12 = vector.multi_reduction <add>, %11, %cst_6 [1] : vector<8x4xf32> to vector<8xf32>
    %13 = vector.shape_cast %12 : vector<8xf32> to vector<8x1xf32>
    %14 = tpu.reciprocal %13 {approx = true} : vector<8x1xf32> -> vector<8x1xf32>
    %15 = vector.broadcast %14 : vector<8x1xf32> to vector<8x4xf32>
    %16 = arith.mulf %11, %15 : vector<8x4xf32>
    %17 = vector.extract_strided_slice %16 {offsets = [0, 0], sizes = [8, 1], strides = [1, 1]} : vector<8x4xf32> to vector<8x1xf32>
    %18 = vector.extract_strided_slice %2 {offsets = [0, 128], sizes = [8, 128], strides = [1, 1]} : vector<8x640xf32> to vector<8x128xf32>
    %19 = vector.broadcast %17 : vector<8x1xf32> to vector<8x128xf32>
    %20 = arith.mulf %19, %18 : vector<8x128xf32>
    %21 = vector.extract_strided_slice %16 {offsets = [0, 1], sizes = [8, 1], strides = [1, 1]} : vector<8x4xf32> to vector<8x1xf32>
    %22 = vector.extract_strided_slice %2 {offsets = [0, 256], sizes = [8, 128], strides = [1, 1]} : vector<8x640xf32> to vector<8x128xf32>
    %23 = vector.broadcast %21 : vector<8x1xf32> to vector<8x128xf32>
    %24 = arith.mulf %23, %22 : vector<8x128xf32>
    %25 = arith.addf %20, %24 : vector<8x128xf32>
    %26 = vector.extract_strided_slice %16 {offsets = [0, 2], sizes = [8, 1], strides = [1, 1]} : vector<8x4xf32> to vector<8x1xf32>
    %27 = vector.extract_strided_slice %2 {offsets = [0, 384], sizes = [8, 128], strides = [1, 1]} : vector<8x640xf32> to vector<8x128xf32>
    %28 = vector.broadcast %26 : vector<8x1xf32> to vector<8x128xf32>
    %29 = arith.mulf %28, %27 : vector<8x128xf32>
    %30 = arith.addf %25, %29 : vector<8x128xf32>
    %31 = vector.extract_strided_slice %16 {offsets = [0, 3], sizes = [8, 1], strides = [1, 1]} : vector<8x4xf32> to vector<8x1xf32>
    %32 = vector.extract_strided_slice %2 {offsets = [0, 512], sizes = [8, 128], strides = [1, 1]} : vector<8x640xf32> to vector<8x128xf32>
    %33 = vector.broadcast %31 : vector<8x1xf32> to vector<8x128xf32>
    %34 = arith.mulf %33, %32 : vector<8x128xf32>
    %35 = arith.addf %30, %34 : vector<8x128xf32>
    %c0_7 = arith.constant 0 : index
    %c0_8 = arith.constant 0 : index
    %36 = vector.load %arg4[%c0_7, %c0_8] : memref<4x128xf32, #tpu.memory_space<vmem>>, vector<4x128xf32>
    %cst_9 = arith.constant dense<0.000000e+00> : vector<8x128xf32>
    %37 = tpu.matmul %16, %36, %cst_9 {dimension_numbers = #tpu.dot_dimension_numbers<[1], [0], [0], [1], [0, 0, 1, 1], [], []>} : vector<8x4xf32>, vector<4x128xf32>, vector<8x128xf32> -> vector<8x128xf32>
    %38 = arith.addf %35, %37 : vector<8x128xf32>
    %c0_10 = arith.constant 0 : index
    %c0_11 = arith.constant 0 : index
    %39 = vector.load %arg5[%c0_10, %c0_11] : memref<8x128xf32, #tpu.memory_space<vmem>>, vector<8x128xf32>
    tpu.vector_store %arg5[%c0_10, %c0_11], %38 {strides = array<i32>} : memref<8x128xf32, #tpu.memory_space<vmem>>, vector<8x128xf32>,
    return
  }
  func.func @transform_0(%arg0: i32) -> (i32, i32) {
    %c0_i32 = arith.constant 0 : i32
    %c0_i32_0 = arith.constant 0 : i32
    return %arg0, %c0_i32 : i32, i32
  }
  func.func @transform_1(%arg0: i32) -> (i32, i32) {
    %c0_i32 = arith.constant 0 : i32
    %c0_i32_0 = arith.constant 0 : i32
    %c0_i32_1 = arith.constant 0 : i32
    return %c0_i32, %c0_i32_0 : i32, i32
  }
  func.func @transform_2(%arg0: i32) -> (i32, i32) {
    %c0_i32 = arith.constant 0 : i32
    %c0_i32_0 = arith.constant 0 : i32
    %c0_i32_1 = arith.constant 0 : i32
    return %c0_i32, %c0_i32_0 : i32, i32
  }
  func.func @transform_3(%arg0: i32) -> (i32, i32) {
    %c0_i32 = arith.constant 0 : i32
    %c0_i32_0 = arith.constant 0 : i32
    %c0_i32_1 = arith.constant 0 : i32
    return %c0_i32, %c0_i32_0 : i32, i32
  }
  func.func @transform_4(%arg0: i32) -> (i32, i32) {
    %c0_i32 = arith.constant 0 : i32
    %c0_i32_0 = arith.constant 0 : i32
    return %arg0, %c0_i32 : i32, i32
  }
}

</mosaic_0001>

<llo_original>
// kernel: tpu_custom_call.1
$region0: #{tpu_custom_call.1}
  #allocation0 [shape = 'u32[]', space=smem, size = 0x4, offset = 0x4, fixed_abs, tag = 'smem constant byte address 0x4 - core index']
  #allocation1 [shape = 'u32[144,128]{1,0:T(1,128)}', space=vmem, size = 0x12000, scoped, tag = 'internal scratch']
  %s0 = inlined_call_operand.vmem [shape: f32[10,5], index: 0, kind: input, shape index: {}]
  %s1 = inlined_call_operand.hbm [shape: f32[5,640], index: 1, kind: input, shape index: {}]
  %s2 = inlined_call_operand.vmem [shape: f32[1,128], index: 2, kind: input, shape index: {}]
  %s3 = inlined_call_operand.vmem [shape: f32[4,128], index: 3, kind: input, shape index: {}]
  %s4 = inlined_call_operand.hbm [shape: f32[10,128], index: 4, kind: output, shape index: {}]
  %s5 = sld [smem:[#allocation0]]
  $region53: #{tpu_custom_call.1} parent=0
    _
  %s7 = ssub.s32 1, %s5
  %s8 = scalar_select 0, %s7, %s5
  $region1: #{tpu_custom_call.1} parent=0
    #allocation2 [shape = 'u8[20480]{0}', space=vmem, size = 0x5000, scoped, tag = 'input window, operand 1, single buffered']
    #allocation3 [shape = 's32[2]{0}', space=sflag, size = 0x8, scoped, tag = 'scoped memory for tpu_custom_call.1']
    #allocation4 [shape = 's32[2]{0}', space=sflag, size = 0x8, scoped, tag = 'scoped memory for tpu_custom_call.1']
    #allocation5 [shape = 'u8[8192]{0}', space=vmem, size = 0x2000, scoped, tag = 'output window, operand 0']
    %9 = vsyncpa [#allocation3], 0
    %10 = vsyncpa [#allocation4], 0
    %s11 = scalar_lea.sflag [#allocation4], 1
    %12 = vsyncpa %s11, 0
    loop: start=0, step=1, limit=4
    $region2: #{tpu_custom_call.1} parent=1 // loop_pre_header
      _
    $region3: #{tpu_custom_call.1} parent=1 // loop_header
      %s14 = sphi 0, %s18
      %p15 = scmp.ge.s32.totalorder %s14, 4
      %s24 = sphi 0, %s26
      %s27 = sphi 0, %s24
      %s28 = sphi 0, %s27
      %s44 = sphi 0, %s28
      %s48 = sphi 0, %s48
      %s50 = sphi 0, %s48
      %s51 = sphi 0, %s50
      %s65 = sphi 0, %s51
      %s69 = sphi 0, %s69
      %s71 = sphi 0, %s69
      %s72 = sphi 0, %s71
      %s86 = sphi 0, %s72
      %s90 = sphi 0, %s90
      %s92 = sphi 0, %s90
      %s93 = sphi 0, %s92
      %s107 = sphi 0, %s93
      %s113 = sphi 0, %s115
      %s116 = sphi 0, %s113
      %s117 = sphi 0, %s116
      %s133 = sphi 0, %s117
    $region4: #{tpu_custom_call.1} parent=1 // loop_header_branch
      %17 = sbr.rel (%p15) target = $region8
    $region5: #{tpu_custom_call.1} parent=1 // loop_body
      %s19 = ssub.s32 %s14, 1
      %s20 = ssub.s32 %s14, 2
      %s21 = sadd.s32 %s14, 1
      %s22 = ssub.s32 %s14, %s21
      %p23 = scmp.eq.s32.totalorder %s22, 0
      %s25 = sadd.s32 %s24, 1
      %s26 = scalar_select %p23, %s24, %s25
      %p29 = pneg %p23
      %p30 = scmp.eq.s32.totalorder %s14, 1
      %p31 = por %p29, %p30
      %p32 = scmp.ne.s32.totalorder %s24, %s27
      %p33 = scmp.eq.s32.totalorder %s14, 0
      %p34 = por %p32, %p33
      %p35 = scmp.ne.s32.totalorder %s24, %s27
      %p36 = scmp.eq.s32.totalorder %s19, 1
      %p37 = por %p35, %p36
      %p38 = scmp.ne.s32.totalorder %s27, %s28
      %p39 = scmp.eq.s32.totalorder %s19, 0
      %p40 = por %p38, %p39
      %p41 = scmp.ne.s32.totalorder %s27, %s28
      %p42 = scmp.eq.s32.totalorder %s20, 1
      %p43 = por %p41, %p42
      %p45 = scmp.ne.s32.totalorder %s28, %s44
      %p46 = scmp.eq.s32.totalorder %s20, 0
      %p47 = por %p45, %p46
      %s49 = sadd.s32 %s48, 1
      %p52 = scmp.eq.s32.totalorder %s14, 1
      %p53 = scmp.ne.s32.totalorder %s48, %s50
      %p54 = scmp.eq.s32.totalorder %s14, 0
      %p55 = por %p53, %p54
      %p56 = scmp.ne.s32.totalorder %s48, %s50
      %p57 = scmp.eq.s32.totalorder %s19, 1
      %p58 = por %p56, %p57
      %p59 = scmp.ne.s32.totalorder %s50, %s51
      %p60 = scmp.eq.s32.totalorder %s19, 0
      %p61 = por %p59, %p60
      %p62 = scmp.ne.s32.totalorder %s50, %s51
      %p63 = scmp.eq.s32.totalorder %s20, 1
      %p64 = por %p62, %p63
      %p66 = scmp.ne.s32.totalorder %s51, %s65
      %p67 = scmp.eq.s32.totalorder %s20, 0
      %p68 = por %p66, %p67
      %s70 = sadd.s32 %s69, 1
      %p73 = scmp.eq.s32.totalorder %s14, 1
      %p74 = scmp.ne.s32.totalorder %s69, %s71
      %p75 = scmp.eq.s32.totalorder %s14, 0
      %p76 = por %p74, %p75
      %p77 = scmp.ne.s32.totalorder %s69, %s71
      %p78 = scmp.eq.s32.totalorder %s19, 1
      %p79 = por %p77, %p78
      %p80 = scmp.ne.s32.totalorder %s71, %s72
      %p81 = scmp.eq.s32.totalorder %s19, 0
      %p82 = por %p80, %p81
      %p83 = scmp.ne.s32.totalorder %s71, %s72
      %p84 = scmp.eq.s32.totalorder %s20, 1
      %p85 = por %p83, %p84
      %p87 = scmp.ne.s32.totalorder %s72, %s86
      %p88 = scmp.eq.s32.totalorder %s20, 0
      %p89 = por %p87, %p88
      %s91 = sadd.s32 %s90, 1
      %p94 = scmp.eq.s32.totalorder %s14, 1
      %p95 = scmp.ne.s32.totalorder %s90, %s92
      %p96 = scmp.eq.s32.totalorder %s14, 0
      %p97 = por %p95, %p96
      %p98 = scmp.ne.s32.totalorder %s90, %s92
      %p99 = scmp.eq.s32.totalorder %s19, 1
      %p100 = por %p98, %p99
      %p101 = scmp.ne.s32.totalorder %s92, %s93
      %p102 = scmp.eq.s32.totalorder %s19, 0
      %p103 = por %p101, %p102
      %p104 = scmp.ne.s32.totalorder %s92, %s93
      %p105 = scmp.eq.s32.totalorder %s20, 1
      %p106 = por %p104, %p105
      %p108 = scmp.ne.s32.totalorder %s93, %s107
      %p109 = scmp.eq.s32.totalorder %s20, 0
      %p110 = por %p108, %p109
      %s111 = ssub.s32 %s14, %s21
      %p112 = scmp.eq.s32.totalorder %s111, 0
      %s114 = sadd.s32 %s113, 1
      %s115 = scalar_select %p112, %s113, %s114
      %p118 = pneg %p112
      %p119 = scmp.eq.s32.totalorder %s14, 1
      %p120 = por %p118, %p119
      %p121 = scmp.ne.s32.totalorder %s113, %s116
      %p122 = scmp.eq.s32.totalorder %s14, 0
      %p123 = por %p121, %p122
      %p124 = scmp.ne.s32.totalorder %s113, %s116
      %p125 = scmp.eq.s32.totalorder %s19, 1
      %p126 = por %p124, %p125
      %p127 = scmp.ne.s32.totalorder %s116, %s117
      %p128 = scmp.eq.s32.totalorder %s19, 0
      %p129 = por %p127, %p128
      %p130 = scmp.ne.s32.totalorder %s116, %s117
      %p131 = scmp.eq.s32.totalorder %s20, 1
      %p132 = por %p130, %p131
      %p134 = scmp.ne.s32.totalorder %s117, %s133
      %p135 = scmp.eq.s32.totalorder %s20, 0
      %p136 = por %p134, %p135
      %p137 = scmp.le.s32.totalorder 1, %s14
      %p138 = scmp.lt.s32.totalorder %s14, 3
      %p139 = pnand %p137, %p138
      %p140 = pneg %p139
      // Predicated region
      $region9: #{tpu_custom_call.1} parent=5 // pred_check
        _
      $region10: #{tpu_custom_call.1} parent=5 // pred_check_branch
        %142 = sbr.rel (%p139) target = $region12
      $region11: #{tpu_custom_call.1} parent=5 // pred_region
        %s143 = ssub.s32 %s14, 1
        // Predicated region
        $region13: #{tpu_custom_call.1} parent=11 // pred_check
          %p144 = pneg %p61
        $region14: #{tpu_custom_call.1} parent=11 // pred_check_branch
          %146 = sbr.rel (%p144) target = $region16
        $region15: #{tpu_custom_call.1} parent=11 // pred_region
          %s148 = ssub.s32 640, 640
          %149 = vsyncadd [#allocation3], %s148
          %s151 = sshll.u32 [#allocation2], 4
          %s152 = int_to_ptr.vmem [resolvable:$true] %s151
          %154 = dma.hbm_to_vmem [thread:$0]  %s1, 640, %s152, [#allocation3]
        $region16: #{tpu_custom_call.1} parent=11 // pred_fallthru
          _
        // Predicated region
        $region17: #{tpu_custom_call.1} parent=11 // pred_check
          %p155 = pneg %p82
        $region18: #{tpu_custom_call.1} parent=11 // pred_check_branch
          %157 = sbr.rel (%p155) target = $region20
        $region19: #{tpu_custom_call.1} parent=11 // pred_region
          _
        $region20: #{tpu_custom_call.1} parent=11 // pred_fallthru
          _
        // Predicated region
        $region21: #{tpu_custom_call.1} parent=11 // pred_check
          %p158 = pneg %p103
        $region22: #{tpu_custom_call.1} parent=11 // pred_check_branch
          %160 = sbr.rel (%p158) target = $region24
        $region23: #{tpu_custom_call.1} parent=11 // pred_region
          _
        $region24: #{tpu_custom_call.1} parent=11 // pred_fallthru
          _
      $region12: #{tpu_custom_call.1} parent=5 // pred_fallthru
        _
      %p161 = scmp.lt.s32.totalorder %s14, 2
      // Predicated region
      $region25: #{tpu_custom_call.1} parent=5 // pred_check
        %p162 = pneg %p161
      $region26: #{tpu_custom_call.1} parent=5 // pred_check_branch
        %164 = sbr.rel (%p162) target = $region28
      $region27: #{tpu_custom_call.1} parent=5 // pred_region
        // Predicated region
        $region29: #{tpu_custom_call.1} parent=27 // pred_check
          %p165 = pneg %p34
        $region30: #{tpu_custom_call.1} parent=27 // pred_check_branch
          %167 = sbr.rel (%p165) target = $region32
        $region31: #{tpu_custom_call.1} parent=27 // pred_region
          %p168 = scmp.lt.s32.totalorder %s14, 1
          %s169 = scalar_select %p168, %s14, 1
          %s170 = smul.addr %s169, 8
          %s171 = scalar_lea.vmem %s0, %s170
        $region32: #{tpu_custom_call.1} parent=27 // pred_fallthru
          _
      $region28: #{tpu_custom_call.1} parent=5 // pred_fallthru
        _
      %p172 = scmp.le.s32.totalorder 1, %s14
      %p173 = scmp.lt.s32.totalorder %s14, 3
      %p174 = pnand %p172, %p173
      %p175 = pneg %p174
      // Predicated region
      $region33: #{tpu_custom_call.1} parent=5 // pred_check
        _
      $region34: #{tpu_custom_call.1} parent=5 // pred_check_branch
        %177 = sbr.rel (%p174) target = $region36
      $region35: #{tpu_custom_call.1} parent=5 // pred_region
        %s178 = ssub.s32 %s14, 1
        // Predicated region
        $region37: #{tpu_custom_call.1} parent=35 // pred_check
          %p179 = pneg %p61
        $region38: #{tpu_custom_call.1} parent=35 // pred_check_branch
          %181 = sbr.rel (%p179) target = $region40
        $region39: #{tpu_custom_call.1} parent=35 // pred_region
          %182 = dma.done [#allocation3], 640
        $region40: #{tpu_custom_call.1} parent=35 // pred_fallthru
          _
        %p183 = scmp.lt.s32.totalorder %s19, 1
        %s184 = scalar_select %p183, %s19, 1
        %s185 = smul.addr %s184, 8
        %s186 = scalar_lea.vmem %s0, %s185
        %p187 = pneg %p40
        %p188 = pneg %p37
        %p189 = pneg %p61
        %p190 = pneg %p58
        %p191 = pneg %p82
        %p192 = pneg %p79
        %p193 = pneg %p103
        %p194 = pneg %p100
        %p195 = pneg %p129
        %p196 = pneg %p126
        %s197 = sand.u32 %s116, 1
        %s198 = scalar_lea.sflag [#allocation4], %s197
        %s199 = sand.u32 %s116, 1
        %s200 = smul.addr %s199, 8
        %s201 = scalar_lea.vmem [#allocation5], %s200
        %p202 = scmp.lt.s32.totalorder %s19, 1
        %s203 = scalar_select %p202, %s19, 1
        %s204 = smul.addr %s203, 8
        %s205 = scalar_lea.vmem %s0, %s204
        %v206 = vld [vmem:[%s205] sm:$0xff]
        %v207 = vld [vmem:[#allocation2] sm:$0x1f]
        %v208 = vld [vmem:[#allocation2 + $0x8] sm:$0x1f]
        %v209 = vld [vmem:[#allocation2 + $0x10] sm:$0x1f]
        %v210 = vld [vmem:[#allocation2 + $0x18] sm:$0x1f]
        %v211 = vld [vmem:[#allocation2 + $0x20] sm:$0x1f]
        %vm212 = vcmask 39936
        %v214 = vsel %vm212, %v206, 0
        %vm216 = vcmask 1044480
        %v218 = vsel %vm216, %v207, 0
        %v221 = vsel %vm216, %v208, 0
        %v224 = vsel %vm216, %v209, 0
        %v227 = vsel %vm216, %v210, 0
        %v230 = vsel %vm216, %v211, 0
        %232 = vmatprep.subr.mxu0 %v221
        %233 = vmatpush1.msra.mxu0 %v218
        %234 = vmatprep.subr.mxu0 0.0
        %235 = vmatpush1.msra.mxu0 0.0
        %236 = vmatprep.subr.mxu0 0.0
        %237 = vmatpush1.msra.mxu0 0.0
        %238 = vmatprep.subr.mxu0 0.0
        %239 = vmatpush1.msra.mxu0 0.0
        %240 = vmatprep.subr.mxu0 0.0
        %241 = vmatpush1.msra.mxu0 0.0
        %242 = vmatprep.subr.mxu0 0.0
        %243 = vmatpush1.msra.mxu0 0.0
        %244 = vmatprep.subr.mxu0 0.0
        %245 = vmatpush1.msra.mxu0 0.0
        %246 = vmatprep.subr.mxu0 0.0
        %247 = vmatpush1.msra.mxu0 0.0
        %248 = vmatprep.subr.mxu0 0.0
        %249 = vmatpush1.msra.mxu0 0.0
        %250 = vmatprep.subr.mxu0 0.0
        %251 = vmatpush1.msra.mxu0 0.0
        %252 = vmatprep.subr.mxu0 0.0
        %253 = vmatpush1.msra.mxu0 0.0
        %254 = vmatprep.subr.mxu0 0.0
        %255 = vmatpush1.msra.mxu0 0.0
        %256 = vmatprep.subr.mxu0 0.0
        %257 = vmatpush1.msra.mxu0 0.0
        %258 = vmatprep.subr.mxu0 0.0
        %259 = vmatpush1.msra.mxu0 0.0
        %260 = vmatprep.subr.mxu0 0.0
        %261 = vmatpush1.msra.mxu0 0.0
        %262 = vmatprep.subr.mxu0 0.0
        %263 = vmatpush1.msra.mxu0 0.0
        %264 = vmatprep.subr.mxu0 0.0
        %265 = vmatpush1.msra.mxu0 0.0
        %266 = vmatprep.subr.mxu0 0.0
        %267 = vmatpush1.msra.mxu0 0.0
        %268 = vmatprep.subr.mxu0 0.0
        %269 = vmatpush1.msra.mxu0 0.0
        %270 = vmatprep.subr.mxu0 0.0
        %271 = vmatpush1.msra.mxu0 0.0
        %272 = vmatprep.subr.mxu0 0.0
        %273 = vmatpush1.msra.mxu0 0.0
        %274 = vmatprep.subr.mxu0 0.0
        %275 = vmatpush1.msra.mxu0 0.0
        %276 = vmatprep.subr.mxu0 0.0
        %277 = vmatpush1.msra.mxu0 0.0
        %278 = vmatprep.subr.mxu0 0.0
        %279 = vmatpush1.msra.mxu0 0.0
        %280 = vmatprep.subr.mxu0 0.0
        %281 = vmatpush1.msra.mxu0 0.0
        %282 = vmatprep.subr.mxu0 0.0
        %283 = vmatpush1.msra.mxu0 0.0
        %284 = vmatprep.subr.mxu0 0.0
        %285 = vmatpush1.msra.mxu0 0.0
        %286 = vmatprep.subr.mxu0 0.0
        %287 = vmatpush1.msra.mxu0 0.0
        %288 = vmatprep.subr.mxu0 0.0
        %289 = vmatpush1.msra.mxu0 0.0
        %290 = vmatprep.subr.mxu0 0.0
        %291 = vmatpush1.msra.mxu0 0.0
        %292 = vmatprep.subr.mxu0 0.0
        %293 = vmatpush1.msra.mxu0 0.0
        %294 = vmatprep.subr.mxu0 0.0
        %295 = vmatpush1.msra.mxu0 0.0
        %296 = vmatprep.mubr.f32.mxu0 0.0
        %297 = vmatmul.mubr.f32.gmra.mrb[0].mxu0 %v214
        %v298 = vpop.f32.mrb[0].mxu0
        %v299 = vadd.f32 0.0, %v298
        %v300 = vpop.f32.mrb[0].mxu0
        %v301 = vadd.f32 0.0, %v300
        %302 = vdwg.mxu0
        %303 = vmatprep.subr.mxu0 %v227
        %304 = vmatpush1.msra.mxu0 %v224
        %305 = vmatprep.subr.mxu0 0.0
        %306 = vmatpush1.msra.mxu0 0.0
        %307 = vmatprep.subr.mxu0 0.0
        %308 = vmatpush1.msra.mxu0 0.0
        %309 = vmatprep.subr.mxu0 0.0
        %310 = vmatpush1.msra.mxu0 0.0
        %311 = vmatprep.subr.mxu0 0.0
        %312 = vmatpush1.msra.mxu0 0.0
        %313 = vmatprep.subr.mxu0 0.0
        %314 = vmatpush1.msra.mxu0 0.0
        %315 = vmatprep.subr.mxu0 0.0
        %316 = vmatpush1.msra.mxu0 0.0
        %317 = vmatprep.subr.mxu0 0.0
        %318 = vmatpush1.msra.mxu0 0.0
        %319 = vmatprep.subr.mxu0 0.0
        %320 = vmatpush1.msra.mxu0 0.0
        %321 = vmatprep.subr.mxu0 0.0
        %322 = vmatpush1.msra.mxu0 0.0
        %323 = vmatprep.subr.mxu0 0.0
        %324 = vmatpush1.msra.mxu0 0.0
        %325 = vmatprep.subr.mxu0 0.0
        %326 = vmatpush1.msra.mxu0 0.0
        %327 = vmatprep.subr.mxu0 0.0
        %328 = vmatpush1.msra.mxu0 0.0
        %329 = vmatprep.subr.mxu0 0.0
        %330 = vmatpush1.msra.mxu0 0.0
        %331 = vmatprep.subr.mxu0 0.0
        %332 = vmatpush1.msra.mxu0 0.0
        %333 = vmatprep.subr.mxu0 0.0
        %334 = vmatpush1.msra.mxu0 0.0
        %335 = vmatprep.subr.mxu0 0.0
        %336 = vmatpush1.msra.mxu0 0.0
        %337 = vmatprep.subr.mxu0 0.0
        %338 = vmatpush1.msra.mxu0 0.0
        %339 = vmatprep.subr.mxu0 0.0
        %340 = vmatpush1.msra.mxu0 0.0
        %341 = vmatprep.subr.mxu0 0.0
        %342 = vmatpush1.msra.mxu0 0.0
        %343 = vmatprep.subr.mxu0 0.0
        %344 = vmatpush1.msra.mxu0 0.0
        %345 = vmatprep.subr.mxu0 0.0
        %346 = vmatpush1.msra.mxu0 0.0
        %347 = vmatprep.subr.mxu0 0.0
        %348 = vmatpush1.msra.mxu0 0.0
        %349 = vmatprep.subr.mxu0 0.0
        %350 = vmatpush1.msra.mxu0 0.0
        %351 = vmatprep.subr.mxu0 0.0
        %352 = vmatpush1.msra.mxu0 0.0
        %353 = vmatprep.subr.mxu0 0.0
        %354 = vmatpush1.msra.mxu0 0.0
        %355 = vmatprep.subr.mxu0 0.0
        %356 = vmatpush1.msra.mxu0 0.0
        %357 = vmatprep.subr.mxu0 0.0
        %358 = vmatpush1.msra.mxu0 0.0
        %359 = vmatprep.subr.mxu0 0.0
        %360 = vmatpush1.msra.mxu0 0.0
        %361 = vmatprep.subr.mxu0 0.0
        %362 = vmatpush1.msra.mxu0 0.0
        %363 = vmatprep.subr.mxu0 0.0
        %364 = vmatpush1.msra.mxu0 0.0
        %365 = vmatprep.subr.mxu0 0.0
        %366 = vmatpush1.msra.mxu0 0.0
        %367 = vmatprep.mubr.f32.mxu0 0.0
        %368 = vmatmul.mubr.f32.gmra.mrb[0].mxu0 %v214
        %v369 = vpop.f32.mrb[0].mxu0
        %v370 = vadd.f32 0.0, %v369
        %v371 = vpop.f32.mrb[0].mxu0
        %v372 = vadd.f32 0.0, %v371
        %373 = vdwg.mxu0
        %374 = vmatprep.subr.mxu0 0.0
        %375 = vmatpush1.msra.mxu0 %v230
        %376 = vmatprep.subr.mxu0 0.0
        %377 = vmatpush1.msra.mxu0 0.0
        %378 = vmatprep.subr.mxu0 0.0
        %379 = vmatpush1.msra.mxu0 0.0
        %380 = vmatprep.subr.mxu0 0.0
        %381 = vmatpush1.msra.mxu0 0.0
        %382 = vmatprep.subr.mxu0 0.0
        %383 = vmatpush1.msra.mxu0 0.0
        %384 = vmatprep.subr.mxu0 0.0
        %385 = vmatpush1.msra.mxu0 0.0
        %386 = vmatprep.subr.mxu0 0.0
        %387 = vmatpush1.msra.mxu0 0.0
        %388 = vmatprep.subr.mxu0 0.0
        %389 = vmatpush1.msra.mxu0 0.0
        %390 = vmatprep.subr.mxu0 0.0
        %391 = vmatpush1.msra.mxu0 0.0
        %392 = vmatprep.subr.mxu0 0.0
        %393 = vmatpush1.msra.mxu0 0.0
        %394 = vmatprep.subr.mxu0 0.0
        %395 = vmatpush1.msra.mxu0 0.0
        %396 = vmatprep.subr.mxu0 0.0
        %397 = vmatpush1.msra.mxu0 0.0
        %398 = vmatprep.subr.mxu0 0.0
        %399 = vmatpush1.msra.mxu0 0.0
        %400 = vmatprep.subr.mxu0 0.0
        %401 = vmatpush1.msra.mxu0 0.0
        %402 = vmatprep.subr.mxu0 0.0
        %403 = vmatpush1.msra.mxu0 0.0
        %404 = vmatprep.subr.mxu0 0.0
        %405 = vmatpush1.msra.mxu0 0.0
        %406 = vmatprep.subr.mxu0 0.0
        %407 = vmatpush1.msra.mxu0 0.0
        %408 = vmatprep.subr.mxu0 0.0
        %409 = vmatpush1.msra.mxu0 0.0
        %410 = vmatprep.subr.mxu0 0.0
        %411 = vmatpush1.msra.mxu0 0.0
        %412 = vmatprep.subr.mxu0 0.0
        %413 = vmatpush1.msra.mxu0 0.0
        %414 = vmatprep.subr.mxu0 0.0
        %415 = vmatpush1.msra.mxu0 0.0
        %416 = vmatprep.subr.mxu0 0.0
        %417 = vmatpush1.msra.mxu0 0.0
        %418 = vmatprep.subr.mxu0 0.0
        %419 = vmatpush1.msra.mxu0 0.0
        %420 = vmatprep.subr.mxu0 0.0
        %421 = vmatpush1.msra.mxu0 0.0
        %422 = vmatprep.subr.mxu0 0.0
        %423 = vmatpush1.msra.mxu0 0.0
        %424 = vmatprep.subr.mxu0 0.0
        %425 = vmatpush1.msra.mxu0 0.0
        %426 = vmatprep.subr.mxu0 0.0
        %427 = vmatpush1.msra.mxu0 0.0
        %428 = vmatprep.subr.mxu0 0.0
        %429 = vmatpush1.msra.mxu0 0.0
        %430 = vmatprep.subr.mxu0 0.0
        %431 = vmatpush1.msra.mxu0 0.0
        %432 = vmatprep.subr.mxu0 0.0
        %433 = vmatpush1.msra.mxu0 0.0
        %434 = vmatprep.subr.mxu0 0.0
        %435 = vmatpush1.msra.mxu0 0.0
        %436 = vmatprep.subr.mxu0 0.0
        %437 = vmatpush1.msra.mxu0 0.0
        %438 = vmatprep.mubr.f32.mxu0 0.0
        %439 = vmatmul.mubr.f32.gmra.mrb[0].mxu0 %v214
        %v440 = vpop.f32.mrb[0].mxu0
        %v441 = vadd.f32 0.0, %v440
        %v442 = vpop.f32.mrb[0].mxu0
        %443 = vdwg.mxu0
        %v444 = vld [vmem:[%s2] sm:$0x1]
        %v446 = vlaneseq
        %v447 = vshrl.u32 %v446, 7
        %v448 = vsub.s32 0, %v447
        %v449 = vrot.slane %v444, %v448
        %v451 = vadd.f32 %v299, %v449
        %vm452 = vcmask 31744
        %v453 = vsel %vm452, %v451, -inf
        %454 = vmax.xlane.f32.xlu0 %v453
        %v455 = vpop.xlane.xlu0 %454
        %v456 = vsub.f32 %v451, %v455
        %v457 = vmul.f32 %v456, 1.442695
        %v458 = vpow.pop %v457
        %v459 = vsel %vm452, %v458, 0.0
        %460 = vadd.xlane.f32.xlu0 %v459
        %v461 = vpop.xlane.xlu0 %460
        %v462 = vrcp.pop %v461
        %v463 = vmul.f32 %v458, %v462
        %465 = vset.pattern.permute.xlu0 0
        %466 = vperm.xlu0 %465, %v463
        %v467 = vpop.permute.xlu0 %466
        %v469 = vmul.f32 %v467, %v301
        %470 = vset.pattern.permute.xlu0 1
        %471 = vperm.xlu0 %470, %v463
        %v472 = vpop.permute.xlu0 %471
        %v474 = vmul.f32 %v472, %v370
        %v475 = vadd.f32 %v469, %v474
        %476 = vset.pattern.permute.xlu0 2
        %477 = vperm.xlu0 %476, %v463
        %v478 = vpop.permute.xlu0 %477
        %v480 = vmul.f32 %v478, %v372
        %v481 = vadd.f32 %v475, %v480
        %482 = vset.pattern.permute.xlu0 3
        %483 = vperm.xlu0 %482, %v463
        %v484 = vpop.permute.xlu0 %483
        %v486 = vmul.f32 %v484, %v441
        %v487 = vadd.f32 %v481, %v486
        %v488 = vld [vmem:[%s3] sm:$0xf]
        %v489 = vsel %vm452, %v463, 0
        %vm491 = vcmask 1043456
        %v493 = vsel %vm491, %v488, 0
        %495 = vmatprep.subr.mxu0 0.0
        %496 = vmatpush1.msra.mxu0 %v493
        %497 = vmatprep.subr.mxu0 0.0
        %498 = vmatpush1.msra.mxu0 0.0
        %499 = vmatprep.subr.mxu0 0.0
        %500 = vmatpush1.msra.mxu0 0.0
        %501 = vmatprep.subr.mxu0 0.0
        %502 = vmatpush1.msra.mxu0 0.0
        %503 = vmatprep.subr.mxu0 0.0
        %504 = vmatpush1.msra.mxu0 0.0
        %505 = vmatprep.subr.mxu0 0.0
        %506 = vmatpush1.msra.mxu0 0.0
        %507 = vmatprep.subr.mxu0 0.0
        %508 = vmatpush1.msra.mxu0 0.0
        %509 = vmatprep.subr.mxu0 0.0
        %510 = vmatpush1.msra.mxu0 0.0
        %511 = vmatprep.subr.mxu0 0.0
        %512 = vmatpush1.msra.mxu0 0.0
        %513 = vmatprep.subr.mxu0 0.0
        %514 = vmatpush1.msra.mxu0 0.0
        %515 = vmatprep.subr.mxu0 0.0
        %516 = vmatpush1.msra.mxu0 0.0
        %517 = vmatprep.subr.mxu0 0.0
        %518 = vmatpush1.msra.mxu0 0.0
        %519 = vmatprep.subr.mxu0 0.0
        %520 = vmatpush1.msra.mxu0 0.0
        %521 = vmatprep.subr.mxu0 0.0
        %522 = vmatpush1.msra.mxu0 0.0
        %523 = vmatprep.subr.mxu0 0.0
        %524 = vmatpush1.msra.mxu0 0.0
        %525 = vmatprep.subr.mxu0 0.0
        %526 = vmatpush1.msra.mxu0 0.0
        %527 = vmatprep.subr.mxu0 0.0
        %528 = vmatpush1.msra.mxu0 0.0
        %529 = vmatprep.subr.mxu0 0.0
        %530 = vmatpush1.msra.mxu0 0.0
        %531 = vmatprep.subr.mxu0 0.0
        %532 = vmatpush1.msra.mxu0 0.0
        %533 = vmatprep.subr.mxu0 0.0
        %534 = vmatpush1.msra.mxu0 0.0
        %535 = vmatprep.subr.mxu0 0.0
        %536 = vmatpush1.msra.mxu0 0.0
        %537 = vmatprep.subr.mxu0 0.0
        %538 = vmatpush1.msra.mxu0 0.0
        %539 = vmatprep.subr.mxu0 0.0
        %540 = vmatpush1.msra.mxu0 0.0
        %541 = vmatprep.subr.mxu0 0.0
        %542 = vmatpush1.msra.mxu0 0.0
        %543 = vmatprep.subr.mxu0 0.0
        %544 = vmatpush1.msra.mxu0 0.0
        %545 = vmatprep.subr.mxu0 0.0
        %546 = vmatpush1.msra.mxu0 0.0
        %547 = vmatprep.subr.mxu0 0.0
        %548 = vmatpush1.msra.mxu0 0.0
        %549 = vmatprep.subr.mxu0 0.0
        %550 = vmatpush1.msra.mxu0 0.0
        %551 = vmatprep.subr.mxu0 0.0
        %552 = vmatpush1.msra.mxu0 0.0
        %553 = vmatprep.subr.mxu0 0.0
        %554 = vmatpush1.msra.mxu0 0.0
        %555 = vmatprep.subr.mxu0 0.0
        %556 = vmatpush1.msra.mxu0 0.0
        %557 = vmatprep.subr.mxu0 0.0
        %558 = vmatpush1.msra.mxu0 0.0
        %559 = vmatprep.mubr.f32.mxu0 0.0
        %560 = vmatmul.mubr.f32.gmra.mrb[0].mxu0 %v489
        %v561 = vpop.f32.mrb[0].mxu0
        %v562 = vadd.f32 0.0, %v561
        %v563 = vpop.f32.mrb[0].mxu0
        %564 = vdwg.mxu0
        %v565 = vadd.f32 %v487, %v562
        %566 = vst [vmem:[%s201] sm:$0xff] %v565
        %s567 = sand.u32 %s116, 1
        %s568 = scalar_lea.sflag [#allocation4], %s567
        %s569 = sand.u32 %s116, 1
        %s570 = smul.addr %s569, 8
        %s571 = scalar_lea.vmem [#allocation5], %s570
        // Predicated region
        $region41: #{tpu_custom_call.1} parent=35 // pred_check
          %p572 = pneg %p126
        $region42: #{tpu_custom_call.1} parent=35 // pred_check_branch
          %574 = sbr.rel (%p572) target = $region44
        $region43: #{tpu_custom_call.1} parent=35 // pred_region
          %s576 = ssub.s32 128, 128
          %577 = vsyncadd %s568, %s576
          %s578 = smul.addr %s19, 128
          %s579 = scalar_lea.hbm %s4, %s578
          %s581 = sshll.u32 %s571, 4
          %s582 = int_to_ptr.vmem [resolvable:$true] %s581
          %584 = dma.vmem_to_hbm [thread:$0]  %s582, 128, %s579, %s568
        $region44: #{tpu_custom_call.1} parent=35 // pred_fallthru
          _
      $region36: #{tpu_custom_call.1} parent=5 // pred_fallthru
        _
      %p585 = scmp.le.s32.totalorder 2, %s14
      // Predicated region
      $region45: #{tpu_custom_call.1} parent=5 // pred_check
        %p586 = pneg %p585
      $region46: #{tpu_custom_call.1} parent=5 // pred_check_branch
        %588 = sbr.rel (%p586) target = $region48
      $region47: #{tpu_custom_call.1} parent=5 // pred_region
        %s589 = ssub.s32 %s14, 2
        // Predicated region
        $region49: #{tpu_custom_call.1} parent=47 // pred_check
          %p590 = pneg %p132
        $region50: #{tpu_custom_call.1} parent=47 // pred_check_branch
          %592 = sbr.rel (%p590) target = $region52
        $region51: #{tpu_custom_call.1} parent=47 // pred_region
          %s593 = sand.u32 %s117, 1
          %s594 = scalar_lea.sflag [#allocation4], %s593
          %s595 = sand.u32 %s117, 1
          %s596 = smul.addr %s595, 8
          %s597 = scalar_lea.vmem [#allocation5], %s596
          %598 = dma.done %s594, 128
        $region52: #{tpu_custom_call.1} parent=47 // pred_fallthru
          _
      $region48: #{tpu_custom_call.1} parent=5 // pred_fallthru
        _
    $region6: #{tpu_custom_call.1} parent=1 // loop_footer
      %s18 = sadd.s32 1, %s14
    $region7: #{tpu_custom_call.1} parent=1 // loop_footer_branch
      %13 = sbr.rel target = $region3
    $region8: #{tpu_custom_call.1} parent=1 // loop_exit
      _
    %599 = vsyncpa [#allocation3], 1
    %s600 = scalar_lea.sflag [#allocation3], 1
    %601 = vsyncpa %s600, 1
    %602 = vsyncpa [#allocation4], 1
    %s603 = scalar_lea.sflag [#allocation4], 1
    %604 = vsyncpa %s603, 1

// kernel: tpu_custom_call.1
$region0: #{tpu_custom_call.1}
  #allocation0 [shape = 'u32[]', space=smem, size = 0x4, offset = 0x4, fixed_abs, tag = 'smem constant byte address 0x4 - core index']
  #allocation1 [shape = 'u32[144,128]{1,0:T(1,128)}', space=vmem, size = 0x12000, scoped, tag = 'internal scratch']
  %s0 = inlined_call_operand.vmem [shape: f32[10,5], index: 0, kind: input, shape index: {}]
  %s1 = inlined_call_operand.hbm [shape: f32[5,640], index: 1, kind: input, shape index: {}]
  %s2 = inlined_call_operand.vmem [shape: f32[1,128], index: 2, kind: input, shape index: {}]
  %s3 = inlined_call_operand.vmem [shape: f32[4,128], index: 3, kind: input, shape index: {}]
  %s4 = inlined_call_operand.hbm [shape: f32[10,128], index: 4, kind: output, shape index: {}]
  %s5 = sld [smem:[#allocation0]]
  $region53: #{tpu_custom_call.1} parent=0
    _
  %s7 = ssub.s32 1, %s5
  %s8 = scalar_select 0, %s7, %s5
  $region1: #{tpu_custom_call.1} parent=0
    #allocation2 [shape = 'u8[20480]{0}', space=vmem, size = 0x5000, scoped, tag = 'input window, operand 1, single buffered']
    #allocation3 [shape = 's32[2]{0}', space=sflag, size = 0x8, scoped, tag = 'scoped memory for tpu_custom_call.1']
    #allocation4 [shape = 's32[2]{0}', space=sflag, size = 0x8, scoped, tag = 'scoped memory for tpu_custom_call.1']
    #allocation5 [shape = 'u8[8192]{0}', space=vmem, size = 0x2000, scoped, tag = 'output window, operand 0']
    %9 = vsyncpa [#allocation3], 0
    %10 = vsyncpa [#allocation4], 0
    %s11 = scalar_lea.sflag [#allocation4], 1
    %12 = vsyncpa %s11, 0
    loop: start=0, step=1, limit=4
    $region2: #{tpu_custom_call.1} parent=1 // loop_pre_header
      _
    $region3: #{tpu_custom_call.1} parent=1 // loop_header
      %s14 = sphi 0, %s18
      %p15 = scmp.ge.s32.totalorder %s14, 4
      %s24 = sphi 0, %s26
      %s27 = sphi 0, %s24
      %s28 = sphi 0, %s27
      %s44 = sphi 0, %s28
      %s48 = sphi 0, %s48
      %s50 = sphi 0, %s48
      %s51 = sphi 0, %s50
      %s65 = sphi 0, %s51
      %s69 = sphi 0, %s69
      %s71 = sphi 0, %s69
      %s72 = sphi 0, %s71
      %s86 = sphi 0, %s72
      %s90 = sphi 0, %s90
      %s92 = sphi 0, %s90
      %s93 = sphi 0, %s92
      %s107 = sphi 0, %s93
      %s113 = sphi 0, %s115
      %s116 = sphi 0, %s113
      %s117 = sphi 0, %s116
      %s133 = sphi 0, %s117
    $region4: #{tpu_custom_call.1} parent=1 // loop_header_branch
      %17 = sbr.rel (%p15) target = $region8
    $region5: #{tpu_custom_call.1} parent=1 // loop_body
      %s19 = ssub.s32 %s14, 1
      %s20 = ssub.s32 %s14, 2
      %s21 = sadd.s32 %s14, 1
      %s22 = ssub.s32 %s14, %s21
      %p23 = scmp.eq.s32.totalorder %s22, 0
      %s25 = sadd.s32 %s24, 1
      %s26 = scalar_select %p23, %s24, %s25
      %p29 = pneg %p23
      %p30 = scmp.eq.s32.totalorder %s14, 1
      %p31 = por %p29, %p30
      %p32 = scmp.ne.s32.totalorder %s24, %s27
      %p33 = scmp.eq.s32.totalorder %s14, 0
      %p34 = por %p32, %p33
      %p35 = scmp.ne.s32.totalorder %s24, %s27
      %p36 = scmp.eq.s32.totalorder %s19, 1
      %p37 = por %p35, %p36
      %p38 = scmp.ne.s32.totalorder %s27, %s28
      %p39 = scmp.eq.s32.totalorder %s19, 0
      %p40 = por %p38, %p39
      %p41 = scmp.ne.s32.totalorder %s27, %s28
      %p42 = scmp.eq.s32.totalorder %s20, 1
      %p43 = por %p41, %p42
      %p45 = scmp.ne.s32.totalorder %s28, %s44
      %p46 = scmp.eq.s32.totalorder %s20, 0
      %p47 = por %p45, %p46
      %s49 = sadd.s32 %s48, 1
      %p52 = scmp.eq.s32.totalorder %s14, 1
      %p53 = scmp.ne.s32.totalorder %s48, %s50
      %p54 = scmp.eq.s32.totalorder %s14, 0
      %p55 = por %p53, %p54
      %p56 = scmp.ne.s32.totalorder %s48, %s50
      %p57 = scmp.eq.s32.totalorder %s19, 1
      %p58 = por %p56, %p57
      %p59 = scmp.ne.s32.totalorder %s50, %s51
      %p60 = scmp.eq.s32.totalorder %s19, 0
      %p61 = por %p59, %p60
      %p62 = scmp.ne.s32.totalorder %s50, %s51
      %p63 = scmp.eq.s32.totalorder %s20, 1
      %p64 = por %p62, %p63
      %p66 = scmp.ne.s32.totalorder %s51, %s65
      %p67 = scmp.eq.s32.totalorder %s20, 0
      %p68 = por %p66, %p67
      %s70 = sadd.s32 %s69, 1
      %p73 = scmp.eq.s32.totalorder %s14, 1
      %p74 = scmp.ne.s32.totalorder %s69, %s71
      %p75 = scmp.eq.s32.totalorder %s14, 0
      %p76 = por %p74, %p75
      %p77 = scmp.ne.s32.totalorder %s69, %s71
      %p78 = scmp.eq.s32.totalorder %s19, 1
      %p79 = por %p77, %p78
      %p80 = scmp.ne.s32.totalorder %s71, %s72
      %p81 = scmp.eq.s32.totalorder %s19, 0
      %p82 = por %p80, %p81
      %p83 = scmp.ne.s32.totalorder %s71, %s72
      %p84 = scmp.eq.s32.totalorder %s20, 1
      %p85 = por %p83, %p84
      %p87 = scmp.ne.s32.totalorder %s72, %s86
      %p88 = scmp.eq.s32.totalorder %s20, 0
      %p89 = por %p87, %p88
      %s91 = sadd.s32 %s90, 1
      %p94 = scmp.eq.s32.totalorder %s14, 1
      %p95 = scmp.ne.s32.totalorder %s90, %s92
      %p96 = scmp.eq.s32.totalorder %s14, 0
      %p97 = por %p95, %p96
      %p98 = scmp.ne.s32.totalorder %s90, %s92
      %p99 = scmp.eq.s32.totalorder %s19, 1
      %p100 = por %p98, %p99
      %p101 = scmp.ne.s32.totalorder %s92, %s93
      %p102 = scmp.eq.s32.totalorder %s19, 0
      %p103 = por %p101, %p102
      %p104 = scmp.ne.s32.totalorder %s92, %s93
      %p105 = scmp.eq.s32.totalorder %s20, 1
      %p106 = por %p104, %p105
      %p108 = scmp.ne.s32.totalorder %s93, %s107
      %p109 = scmp.eq.s32.totalorder %s20, 0
      %p110 = por %p108, %p109
      %s111 = ssub.s32 %s14, %s21
      %p112 = scmp.eq.s32.totalorder %s111, 0
      %s114 = sadd.s32 %s113, 1
      %s115 = scalar_select %p112, %s113, %s114
      %p118 = pneg %p112
      %p119 = scmp.eq.s32.totalorder %s14, 1
      %p120 = por %p118, %p119
      %p121 = scmp.ne.s32.totalorder %s113, %s116
      %p122 = scmp.eq.s32.totalorder %s14, 0
      %p123 = por %p121, %p122
      %p124 = scmp.ne.s32.totalorder %s113, %s116
      %p125 = scmp.eq.s32.totalorder %s19, 1
      %p126 = por %p124, %p125
      %p127 = scmp.ne.s32.totalorder %s116, %s117
      %p128 = scmp.eq.s32.totalorder %s19, 0
      %p129 = por %p127, %p128
      %p130 = scmp.ne.s32.totalorder %s116, %s117
      %p131 = scmp.eq.s32.totalorder %s20, 1
      %p132 = por %p130, %p131
      %p134 = scmp.ne.s32.totalorder %s117, %s133
      %p135 = scmp.eq.s32.totalorder %s20, 0
      %p136 = por %p134, %p135
      %p137 = scmp.le.s32.totalorder 1, %s14
      %p138 = scmp.lt.s32.totalorder %s14, 3
      %p139 = pnand %p137, %p138
      %p140 = pneg %p139
      // Predicated region
      $region9: #{tpu_custom_call.1} parent=5 // pred_check
        _
      $region10: #{tpu_custom_call.1} parent=5 // pred_check_branch
        %142 = sbr.rel (%p139) target = $region12
      $region11: #{tpu_custom_call.1} parent=5 // pred_region
        %s143 = ssub.s32 %s14, 1
        // Predicated region
        $region13: #{tpu_custom_call.1} parent=11 // pred_check
          %p144 = pneg %p61
        $region14: #{tpu_custom_call.1} parent=11 // pred_check_branch
          %146 = sbr.rel (%p144) target = $region16
        $region15: #{tpu_custom_call.1} parent=11 // pred_region
          %s148 = ssub.s32 640, 640
          %149 = vsyncadd [#allocation3], %s148
          %s151 = sshll.u32 [#allocation2], 4
          %s152 = int_to_ptr.vmem [resolvable:$true] %s151
          %154 = dma.hbm_to_vmem [thread:$0]  %s1, 640, %s152, [#allocation3]
        $region16: #{tpu_custom_call.1} parent=11 // pred_fallthru
          _
        // Predicated region
        $region17: #{tpu_custom_call.1} parent=11 // pred_check
          %p155 = pneg %p82
        $region18: #{tpu_custom_call.1} parent=11 // pred_check_branch
          %157 = sbr.rel (%p155) target = $region20
        $region19: #{tpu_custom_call.1} parent=11 // pred_region
          _
        $region20: #{tpu_custom_call.1} parent=11 // pred_fallthru
          _
        // Predicated region
        $region21: #{tpu_custom_call.1} parent=11 // pred_check
          %p158 = pneg %p103
        $region22: #{tpu_custom_call.1} parent=11 // pred_check_branch
          %160 = sbr.rel (%p158) target = $region24
        $region23: #{tpu_custom_call.1} parent=11 // pred_region
          _
        $region24: #{tpu_custom_call.1} parent=11 // pred_fallthru
          _
      $region12: #{tpu_custom_call.1} parent=5 // pred_fallthru
        _
      %p161 = scmp.lt.s32.totalorder %s14, 2
      // Predicated region
      $region25: #{tpu_custom_call.1} parent=5 // pred_check
        %p162 = pneg %p161
      $region26: #{tpu_custom_call.1} parent=5 // pred_check_branch
        %164 = sbr.rel (%p162) target = $region28
      $region27: #{tpu_custom_call.1} parent=5 // pred_region
        // Predicated region
        $region29: #{tpu_custom_call.1} parent=27 // pred_check
          %p165 = pneg %p34
        $region30: #{tpu_custom_call.1} parent=27 // pred_check_branch
          %167 = sbr.rel (%p165) target = $region32
        $region31: #{tpu_custom_call.1} parent=27 // pred_region
          %p168 = scmp.lt.s32.totalorder %s14, 1
          %s169 = scalar_select %p168, %s14, 1
          %s170 = smul.addr %s169, 8
          %s171 = scalar_lea.vmem %s0, %s170
        $region32: #{tpu_custom_call.1} parent=27 // pred_fallthru
          _
      $region28: #{tpu_custom_call.1} parent=5 // pred_fallthru
        _
      %p172 = scmp.le.s32.totalorder 1, %s14
      %p173 = scmp.lt.s32.totalorder %s14, 3
      %p174 = pnand %p172, %p173
      %p175 = pneg %p174
      // Predicated region
      $region33: #{tpu_custom_call.1} parent=5 // pred_check
        _
      $region34: #{tpu_custom_call.1} parent=5 // pred_check_branch
        %177 = sbr.rel (%p174) target = $region36
      $region35: #{tpu_custom_call.1} parent=5 // pred_region
        %s178 = ssub.s32 %s14, 1
        // Predicated region
        $region37: #{tpu_custom_call.1} parent=35 // pred_check
          %p179 = pneg %p61
        $region38: #{tpu_custom_call.1} parent=35 // pred_check_branch
          %181 = sbr.rel (%p179) target = $region40
        $region39: #{tpu_custom_call.1} parent=35 // pred_region
          %182 = dma.done [#allocation3], 640
        $region40: #{tpu_custom_call.1} parent=35 // pred_fallthru
          _
        %p183 = scmp.lt.s32.totalorder %s19, 1
        %s184 = scalar_select %p183, %s19, 1
        %s185 = smul.addr %s184, 8
        %s186 = scalar_lea.vmem %s0, %s185
        %p187 = pneg %p40
        %p188 = pneg %p37
        %p189 = pneg %p61
        %p190 = pneg %p58
        %p191 = pneg %p82
        %p192 = pneg %p79
        %p193 = pneg %p103
        %p194 = pneg %p100
        %p195 = pneg %p129
        %p196 = pneg %p126
        %s197 = sand.u32 %s116, 1
        %s198 = scalar_lea.sflag [#allocation4], %s197
        %s199 = sand.u32 %s116, 1
        %s200 = smul.addr %s199, 8
        %s201 = scalar_lea.vmem [#allocation5], %s200
        %p202 = scmp.lt.s32.totalorder %s19, 1
        %s203 = scalar_select %p202, %s19, 1
        %s204 = smul.addr %s203, 8
        %s205 = scalar_lea.vmem %s0, %s204
        %v206 = vld [vmem:[%s205] sm:$0xff]
        %v207 = vld [vmem:[#allocation2] sm:$0x1f]
        %v208 = vld [vmem:[#allocation2 + $0x8] sm:$0x1f]
        %v209 = vld [vmem:[#allocation2 + $0x10] sm:$0x1f]
        %v210 = vld [vmem:[#allocation2 + $0x18] sm:$0x1f]
        %v211 = vld [vmem:[#allocation2 + $0x20] sm:$0x1f]
        %vm212 = vcmask 39936
        %v214 = vsel %vm212, %v206, 0
        %vm216 = vcmask 1044480
        %v218 = vsel %vm216, %v207, 0
        %v221 = vsel %vm216, %v208, 0
        %v224 = vsel %vm216, %v209, 0
        %v227 = vsel %vm216, %v210, 0
        %v230 = vsel %vm216, %v211, 0
        %232 = vmatprep.subr.mxu0 %v221
        %233 = vmatpush1.msra.mxu0 %v218
        %234 = vmatprep.subr.mxu0 0.0
        %235 = vmatpush1.msra.mxu0 0.0
        %236 = vmatprep.subr.mxu0 0.0
        %237 = vmatpush1.msra.mxu0 0.0
        %238 = vmatprep.subr.mxu0 0.0
        %239 = vmatpush1.msra.mxu0 0.0
        %240 = vmatprep.subr.mxu0 0.0
        %241 = vmatpush1.msra.mxu0 0.0
        %242 = vmatprep.subr.mxu0 0.0
        %243 = vmatpush1.msra.mxu0 0.0
        %244 = vmatprep.subr.mxu0 0.0
        %245 = vmatpush1.msra.mxu0 0.0
        %246 = vmatprep.subr.mxu0 0.0
        %247 = vmatpush1.msra.mxu0 0.0
        %248 = vmatprep.subr.mxu0 0.0
        %249 = vmatpush1.msra.mxu0 0.0
        %250 = vmatprep.subr.mxu0 0.0
        %251 = vmatpush1.msra.mxu0 0.0
        %252 = vmatprep.subr.mxu0 0.0
        %253 = vmatpush1.msra.mxu0 0.0
        %254 = vmatprep.subr.mxu0 0.0
        %255 = vmatpush1.msra.mxu0 0.0
        %256 = vmatprep.subr.mxu0 0.0
        %257 = vmatpush1.msra.mxu0 0.0
        %258 = vmatprep.subr.mxu0 0.0
        %259 = vmatpush1.msra.mxu0 0.0
        %260 = vmatprep.subr.mxu0 0.0
        %261 = vmatpush1.msra.mxu0 0.0
        %262 = vmatprep.subr.mxu0 0.0
        %263 = vmatpush1.msra.mxu0 0.0
        %264 = vmatprep.subr.mxu0 0.0
        %265 = vmatpush1.msra.mxu0 0.0
        %266 = vmatprep.subr.mxu0 0.0
        %267 = vmatpush1.msra.mxu0 0.0
        %268 = vmatprep.subr.mxu0 0.0
        %269 = vmatpush1.msra.mxu0 0.0
        %270 = vmatprep.subr.mxu0 0.0
        %271 = vmatpush1.msra.mxu0 0.0
        %272 = vmatprep.subr.mxu0 0.0
        %273 = vmatpush1.msra.mxu0 0.0
        %274 = vmatprep.subr.mxu0 0.0
        %275 = vmatpush1.msra.mxu0 0.0
        %276 = vmatprep.subr.mxu0 0.0
        %277 = vmatpush1.msra.mxu0 0.0
        %278 = vmatprep.subr.mxu0 0.0
        %279 = vmatpush1.msra.mxu0 0.0
        %280 = vmatprep.subr.mxu0 0.0
        %281 = vmatpush1.msra.mxu0 0.0
        %282 = vmatprep.subr.mxu0 0.0
        %283 = vmatpush1.msra.mxu0 0.0
        %284 = vmatprep.subr.mxu0 0.0
        %285 = vmatpush1.msra.mxu0 0.0
        %286 = vmatprep.subr.mxu0 0.0
        %287 = vmatpush1.msra.mxu0 0.0
        %288 = vmatprep.subr.mxu0 0.0
        %289 = vmatpush1.msra.mxu0 0.0
        %290 = vmatprep.subr.mxu0 0.0
        %291 = vmatpush1.msra.mxu0 0.0
        %292 = vmatprep.subr.mxu0 0.0
        %293 = vmatpush1.msra.mxu0 0.0
        %294 = vmatprep.subr.mxu0 0.0
        %295 = vmatpush1.msra.mxu0 0.0
        %296 = vmatprep.mubr.f32.mxu0 0.0
        %297 = vmatmul.mubr.f32.gmra.mrb[0].mxu0 %v214
        %v298 = vpop.f32.mrb[0].mxu0
        %v299 = vadd.f32 0.0, %v298
        %v300 = vpop.f32.mrb[0].mxu0
        %v301 = vadd.f32 0.0, %v300
        %302 = vdwg.mxu0
        %303 = vmatprep.subr.mxu0 %v227
        %304 = vmatpush1.msra.mxu0 %v224
        %305 = vmatprep.subr.mxu0 0.0
        %306 = vmatpush1.msra.mxu0 0.0
        %307 = vmatprep.subr.mxu0 0.0
        %308 = vmatpush1.msra.mxu0 0.0
        %309 = vmatprep.subr.mxu0 0.0
        %310 = vmatpush1.msra.mxu0 0.0
        %311 = vmatprep.subr.mxu0 0.0
        %312 = vmatpush1.msra.mxu0 0.0
        %313 = vmatprep.subr.mxu0 0.0
        %314 = vmatpush1.msra.mxu0 0.0
        %315 = vmatprep.subr.mxu0 0.0
        %316 = vmatpush1.msra.mxu0 0.0
        %317 = vmatprep.subr.mxu0 0.0
        %318 = vmatpush1.msra.mxu0 0.0
        %319 = vmatprep.subr.mxu0 0.0
        %320 = vmatpush1.msra.mxu0 0.0
        %321 = vmatprep.subr.mxu0 0.0
        %322 = vmatpush1.msra.mxu0 0.0
        %323 = vmatprep.subr.mxu0 0.0
        %324 = vmatpush1.msra.mxu0 0.0
        %325 = vmatprep.subr.mxu0 0.0
        %326 = vmatpush1.msra.mxu0 0.0
        %327 = vmatprep.subr.mxu0 0.0
        %328 = vmatpush1.msra.mxu0 0.0
        %329 = vmatprep.subr.mxu0 0.0
        %330 = vmatpush1.msra.mxu0 0.0
        %331 = vmatprep.subr.mxu0 0.0
        %332 = vmatpush1.msra.mxu0 0.0
        %333 = vmatprep.subr.mxu0 0.0
        %334 = vmatpush1.msra.mxu0 0.0
        %335 = vmatprep.subr.mxu0 0.0
        %336 = vmatpush1.msra.mxu0 0.0
        %337 = vmatprep.subr.mxu0 0.0
        %338 = vmatpush1.msra.mxu0 0.0
        %339 = vmatprep.subr.mxu0 0.0
        %340 = vmatpush1.msra.mxu0 0.0
        %341 = vmatprep.subr.mxu0 0.0
        %342 = vmatpush1.msra.mxu0 0.0
        %343 = vmatprep.subr.mxu0 0.0
        %344 = vmatpush1.msra.mxu0 0.0
        %345 = vmatprep.subr.mxu0 0.0
        %346 = vmatpush1.msra.mxu0 0.0
        %347 = vmatprep.subr.mxu0 0.0
        %348 = vmatpush1.msra.mxu0 0.0
        %349 = vmatprep.subr.mxu0 0.0
        %350 = vmatpush1.msra.mxu0 0.0
        %351 = vmatprep.subr.mxu0 0.0
        %352 = vmatpush1.msra.mxu0 0.0
        %353 = vmatprep.subr.mxu0 0.0
        %354 = vmatpush1.msra.mxu0 0.0
        %355 = vmatprep.subr.mxu0 0.0
        %356 = vmatpush1.msra.mxu0 0.0
        %357 = vmatprep.subr.mxu0 0.0
        %358 = vmatpush1.msra.mxu0 0.0
        %359 = vmatprep.subr.mxu0 0.0
        %360 = vmatpush1.msra.mxu0 0.0
        %361 = vmatprep.subr.mxu0 0.0
        %362 = vmatpush1.msra.mxu0 0.0
        %363 = vmatprep.subr.mxu0 0.0
        %364 = vmatpush1.msra.mxu0 0.0
        %365 = vmatprep.subr.mxu0 0.0
        %366 = vmatpush1.msra.mxu0 0.0
        %367 = vmatprep.mubr.f32.mxu0 0.0
        %368 = vmatmul.mubr.f32.gmra.mrb[0].mxu0 %v214
        %v369 = vpop.f32.mrb[0].mxu0
        %v370 = vadd.f32 0.0, %v369
        %v371 = vpop.f32.mrb[0].mxu0
        %v372 = vadd.f32 0.0, %v371
        %373 = vdwg.mxu0
        %374 = vmatprep.subr.mxu0 0.0
        %375 = vmatpush1.msra.mxu0 %v230
        %376 = vmatprep.subr.mxu0 0.0
        %377 = vmatpush1.msra.mxu0 0.0
        %378 = vmatprep.subr.mxu0 0.0
        %379 = vmatpush1.msra.mxu0 0.0
        %380 = vmatprep.subr.mxu0 0.0
        %381 = vmatpush1.msra.mxu0 0.0
        %382 = vmatprep.subr.mxu0 0.0
        %383 = vmatpush1.msra.mxu0 0.0
        %384 = vmatprep.subr.mxu0 0.0
        %385 = vmatpush1.msra.mxu0 0.0
        %386 = vmatprep.subr.mxu0 0.0
        %387 = vmatpush1.msra.mxu0 0.0
        %388 = vmatprep.subr.mxu0 0.0
        %389 = vmatpush1.msra.mxu0 0.0
        %390 = vmatprep.subr.mxu0 0.0
        %391 = vmatpush1.msra.mxu0 0.0
        %392 = vmatprep.subr.mxu0 0.0
        %393 = vmatpush1.msra.mxu0 0.0
        %394 = vmatprep.subr.mxu0 0.0
        %395 = vmatpush1.msra.mxu0 0.0
        %396 = vmatprep.subr.mxu0 0.0
        %397 = vmatpush1.msra.mxu0 0.0
        %398 = vmatprep.subr.mxu0 0.0
        %399 = vmatpush1.msra.mxu0 0.0
        %400 = vmatprep.subr.mxu0 0.0
        %401 = vmatpush1.msra.mxu0 0.0
        %402 = vmatprep.subr.mxu0 0.0
        %403 = vmatpush1.msra.mxu0 0.0
        %404 = vmatprep.subr.mxu0 0.0
        %405 = vmatpush1.msra.mxu0 0.0
        %406 = vmatprep.subr.mxu0 0.0
        %407 = vmatpush1.msra.mxu0 0.0
        %408 = vmatprep.subr.mxu0 0.0
        %409 = vmatpush1.msra.mxu0 0.0
        %410 = vmatprep.subr.mxu0 0.0
        %411 = vmatpush1.msra.mxu0 0.0
        %412 = vmatprep.subr.mxu0 0.0
        %413 = vmatpush1.msra.mxu0 0.0
        %414 = vmatprep.subr.mxu0 0.0
        %415 = vmatpush1.msra.mxu0 0.0
        %416 = vmatprep.subr.mxu0 0.0
        %417 = vmatpush1.msra.mxu0 0.0
        %418 = vmatprep.subr.mxu0 0.0
        %419 = vmatpush1.msra.mxu0 0.0
        %420 = vmatprep.subr.mxu0 0.0
        %421 = vmatpush1.msra.mxu0 0.0
        %422 = vmatprep.subr.mxu0 0.0
        %423 = vmatpush1.msra.mxu0 0.0
        %424 = vmatprep.subr.mxu0 0.0
        %425 = vmatpush1.msra.mxu0 0.0
        %426 = vmatprep.subr.mxu0 0.0
        %427 = vmatpush1.msra.mxu0 0.0
        %428 = vmatprep.subr.mxu0 0.0
        %429 = vmatpush1.msra.mxu0 0.0
        %430 = vmatprep.subr.mxu0 0.0
        %431 = vmatpush1.msra.mxu0 0.0
        %432 = vmatprep.subr.mxu0 0.0
        %433 = vmatpush1.msra.mxu0 0.0
        %434 = vmatprep.subr.mxu0 0.0
        %435 = vmatpush1.msra.mxu0 0.0
        %436 = vmatprep.subr.mxu0 0.0
        %437 = vmatpush1.msra.mxu0 0.0
        %438 = vmatprep.mubr.f32.mxu0 0.0
        %439 = vmatmul.mubr.f32.gmra.mrb[0].mxu0 %v214
        %v440 = vpop.f32.mrb[0].mxu0
        %v441 = vadd.f32 0.0, %v440
        %v442 = vpop.f32.mrb[0].mxu0
        %443 = vdwg.mxu0
        %v444 = vld [vmem:[%s2] sm:$0x1]
        %v446 = vlaneseq
        %v447 = vshrl.u32 %v446, 7
        %v448 = vsub.s32 0, %v447
        %v449 = vrot.slane %v444, %v448
        %v451 = vadd.f32 %v299, %v449
        %vm452 = vcmask 31744
        %v453 = vsel %vm452, %v451, -inf
        %454 = vmax.xlane.f32.xlu0 %v453
        %v455 = vpop.xlane.xlu0 %454
        %v456 = vsub.f32 %v451, %v455
        %v457 = vmul.f32 %v456, 1.442695
        %v458 = vpow.pop %v457
        %v459 = vsel %vm452, %v458, 0.0
        %460 = vadd.xlane.f32.xlu0 %v459
        %v461 = vpop.xlane.xlu0 %460
        %v462 = vrcp.pop %v461
        %v463 = vmul.f32 %v458, %v462
        %465 = vset.pattern.permute.xlu0 0
        %466 = vperm.xlu0 %465, %v463
        %v467 = vpop.permute.xlu0 %466
        %v469 = vmul.f32 %v467, %v301
        %470 = vset.pattern.permute.xlu0 1
        %471 = vperm.xlu0 %470, %v463
        %v472 = vpop.permute.xlu0 %471
        %v474 = vmul.f32 %v472, %v370
        %v475 = vadd.f32 %v469, %v474
        %476 = vset.pattern.permute.xlu0 2
        %477 = vperm.xlu0 %476, %v463
        %v478 = vpop.permute.xlu0 %477
        %v480 = vmul.f32 %v478, %v372
        %v481 = vadd.f32 %v475, %v480
        %482 = vset.pattern.permute.xlu0 3
        %483 = vperm.xlu0 %482, %v463
        %v484 = vpop.permute.xlu0 %483
        %v486 = vmul.f32 %v484, %v441
        %v487 = vadd.f32 %v481, %v486
        %v488 = vld [vmem:[%s3] sm:$0xf]
        %v489 = vsel %vm452, %v463, 0
        %vm491 = vcmask 1043456
        %v493 = vsel %vm491, %v488, 0
        %495 = vmatprep.subr.mxu0 0.0
        %496 = vmatpush1.msra.mxu0 %v493
        %497 = vmatprep.subr.mxu0 0.0
        %498 = vmatpush1.msra.mxu0 0.0
        %499 = vmatprep.subr.mxu0 0.0
        %500 = vmatpush1.msra.mxu0 0.0
        %501 = vmatprep.subr.mxu0 0.0
        %502 = vmatpush1.msra.mxu0 0.0
        %503 = vmatprep.subr.mxu0 0.0
        %504 = vmatpush1.msra.mxu0 0.0
        %505 = vmatprep.subr.mxu0 0.0
        %506 = vmatpush1.msra.mxu0 0.0
        %507 = vmatprep.subr.mxu0 0.0
        %508 = vmatpush1.msra.mxu0 0.0
        %509 = vmatprep.subr.mxu0 0.0
        %510 = vmatpush1.msra.mxu0 0.0
        %511 = vmatprep.subr.mxu0 0.0
        %512 = vmatpush1.msra.mxu0 0.0
        %513 = vmatprep.subr.mxu0 0.0
        %514 = vmatpush1.msra.mxu0 0.0
        %515 = vmatprep.subr.mxu0 0.0
        %516 = vmatpush1.msra.mxu0 0.0
        %517 = vmatprep.subr.mxu0 0.0
        %518 = vmatpush1.msra.mxu0 0.0
        %519 = vmatprep.subr.mxu0 0.0
        %520 = vmatpush1.msra.mxu0 0.0
        %521 = vmatprep.subr.mxu0 0.0
        %522 = vmatpush1.msra.mxu0 0.0
        %523 = vmatprep.subr.mxu0 0.0
        %524 = vmatpush1.msra.mxu0 0.0
        %525 = vmatprep.subr.mxu0 0.0
        %526 = vmatpush1.msra.mxu0 0.0
        %527 = vmatprep.subr.mxu0 0.0
        %528 = vmatpush1.msra.mxu0 0.0
        %529 = vmatprep.subr.mxu0 0.0
        %530 = vmatpush1.msra.mxu0 0.0
        %531 = vmatprep.subr.mxu0 0.0
        %532 = vmatpush1.msra.mxu0 0.0
        %533 = vmatprep.subr.mxu0 0.0
        %534 = vmatpush1.msra.mxu0 0.0
        %535 = vmatprep.subr.mxu0 0.0
        %536 = vmatpush1.msra.mxu0 0.0
        %537 = vmatprep.subr.mxu0 0.0
        %538 = vmatpush1.msra.mxu0 0.0
        %539 = vmatprep.subr.mxu0 0.0
        %540 = vmatpush1.msra.mxu0 0.0
        %541 = vmatprep.subr.mxu0 0.0
        %542 = vmatpush1.msra.mxu0 0.0
        %543 = vmatprep.subr.mxu0 0.0
        %544 = vmatpush1.msra.mxu0 0.0
        %545 = vmatprep.subr.mxu0 0.0
        %546 = vmatpush1.msra.mxu0 0.0
        %547 = vmatprep.subr.mxu0 0.0
        %548 = vmatpush1.msra.mxu0 0.0
        %549 = vmatprep.subr.mxu0 0.0
        %550 = vmatpush1.msra.mxu0 0.0
        %551 = vmatprep.subr.mxu0 0.0
        %552 = vmatpush1.msra.mxu0 0.0
        %553 = vmatprep.subr.mxu0 0.0
        %554 = vmatpush1.msra.mxu0 0.0
        %555 = vmatprep.subr.mxu0 0.0
        %556 = vmatpush1.msra.mxu0 0.0
        %557 = vmatprep.subr.mxu0 0.0
        %558 = vmatpush1.msra.mxu0 0.0
        %559 = vmatprep.mubr.f32.mxu0 0.0
        %560 = vmatmul.mubr.f32.gmra.mrb[0].mxu0 %v489
        %v561 = vpop.f32.mrb[0].mxu0
        %v562 = vadd.f32 0.0, %v561
        %v563 = vpop.f32.mrb[0].mxu0
        %564 = vdwg.mxu0
        %v565 = vadd.f32 %v487, %v562
        %566 = vst [vmem:[%s201] sm:$0xff] %v565
        %s567 = sand.u32 %s116, 1
        %s568 = scalar_lea.sflag [#allocation4], %s567
        %s569 = sand.u32 %s116, 1
        %s570 = smul.addr %s569, 8
        %s571 = scalar_lea.vmem [#allocation5], %s570
        // Predicated region
        $region41: #{tpu_custom_call.1} parent=35 // pred_check
          %p572 = pneg %p126
        $region42: #{tpu_custom_call.1} parent=35 // pred_check_branch
          %574 = sbr.rel (%p572) target = $region44
        $region43: #{tpu_custom_call.1} parent=35 // pred_region
          %s576 = ssub.s32 128, 128
          %577 = vsyncadd %s568, %s576
          %s578 = smul.addr %s19, 128
          %s579 = scalar_lea.hbm %s4, %s578
          %s581 = sshll.u32 %s571, 4
          %s582 = int_to_ptr.vmem [resolvable:$true] %s581
          %584 = dma.vmem_to_hbm [thread:$0]  %s582, 128, %s579, %s568
        $region44: #{tpu_custom_call.1} parent=35 // pred_fallthru
          _
      $region36: #{tpu_custom_call.1} parent=5 // pred_fallthru
        _
      %p585 = scmp.le.s32.totalorder 2, %s14
      // Predicated region
      $region45: #{tpu_custom_call.1} parent=5 // pred_check
        %p586 = pneg %p585
      $region46: #{tpu_custom_call.1} parent=5 // pred_check_branch
        %588 = sbr.rel (%p586) target = $region48
      $region47: #{tpu_custom_call.1} parent=5 // pred_region
        %s589 = ssub.s32 %s14, 2
        // Predicated region
        $region49: #{tpu_custom_call.1} parent=47 // pred_check
          %p590 = pneg %p132
        $region50: #{tpu_custom_call.1} parent=47 // pred_check_branch
          %592 = sbr.rel (%p590) target = $region52
        $region51: #{tpu_custom_call.1} parent=47 // pred_region
          %s593 = sand.u32 %s117, 1
          %s594 = scalar_lea.sflag [#allocation4], %s593
          %s595 = sand.u32 %s117, 1
          %s596 = smul.addr %s595, 8
          %s597 = scalar_lea.vmem [#allocation5], %s596
          %598 = dma.done %s594, 128
        $region52: #{tpu_custom_call.1} parent=47 // pred_fallthru
          _
      $region48: #{tpu_custom_call.1} parent=5 // pred_fallthru
        _
    $region6: #{tpu_custom_call.1} parent=1 // loop_footer
      %s18 = sadd.s32 1, %s14
    $region7: #{tpu_custom_call.1} parent=1 // loop_footer_branch
      %13 = sbr.rel target = $region3
    $region8: #{tpu_custom_call.1} parent=1 // loop_exit
      _
    %599 = vsyncpa [#allocation3], 1
    %s600 = scalar_lea.sflag [#allocation3], 1
    %601 = vsyncpa %s600, 1
    %602 = vsyncpa [#allocation4], 1
    %s603 = scalar_lea.sflag [#allocation4], 1
    %604 = vsyncpa %s603, 1

</llo_original>
